<compile_context>
chip_gen: v7x
topology: tpu7x:2x2x1
jax: 0.10.0
libtpu: 0.0.40
codegen_flags: <defaults>
</compile_context>

<pallas_src>
import jax
import jax.numpy as jnp
import numpy as np
from jax.experimental import pallas as pl
from jax.experimental.pallas import tpu as pltpu


def make_sinusoid_table(n_position: int, d_hid: int) -> jnp.ndarray:
    """Deterministic sinusoid encoding table, shape (1, n_position, d_hid)."""
    pos = np.arange(n_position, dtype=np.float64)[:, None]          # (P, 1)
    hid = np.arange(d_hid, dtype=np.float64)[None, :]                # (1, D)
    angle = pos / np.power(10000.0, 2.0 * (hid // 2) / d_hid)        # (P, D)
    table = np.empty_like(angle)
    table[:, 0::2] = np.sin(angle[:, 0::2])
    table[:, 1::2] = np.cos(angle[:, 1::2])
    return jnp.asarray(table[None, ...], dtype=jnp.float32)          # (1, P, D)


def _pos_enc_kernel(x_ref, pos_ref, o_ref):
    # x_ref / o_ref: (row_block, col_block)
    # pos_ref:       (1, col_block)  -- broadcasts along sublanes for free.
    o_ref[...] = x_ref[...] + pos_ref[...]


def _largest_aligned_divisor(n: int, align: int, cap: int):
    """Largest multiple of `align` that divides n and is <= cap (None if n%align)."""
    if n % align != 0:
        return None
    cap = max(cap, align)
    best = align
    d = align
    limit = min(n, cap)
    while d <= limit:
        if n % d == 0:
            best = d
        d += align
    return best


def positional_encoding(x: jnp.ndarray, pos_table: jnp.ndarray,
                        *, donate_x: bool = False) -> jnp.ndarray:
    """x: (B, S, D); pos_table: (1, n_position, D).  Returns x + pos[:, :S]."""
    B, S, D = x.shape
    n_position = pos_table.shape[1]
    assert S <= n_position, (
        f"sequence length {S} exceeds positional table size {n_position}")

    N = S * D
    itemsize = jnp.dtype(x.dtype).itemsize

    # Lane-dense 2-D views (reshapes are free bitcasts for contiguous arrays).
    x2 = x.reshape(B, N)
    pos = pos_table[0, :S, :].astype(x.dtype).reshape(1, N)

    # Row tile: full B unless B is large and 8-aligned (sublane constraint).
    if B % 8 == 0 and B > 256:
        rb = _largest_aligned_divisor(B, 8, 256) or B
    else:
        rb = B

    # Column tile: ~2 MiB blocks, multiple of 128 lanes, dividing N (else full N).
    target_block_bytes = 2 * 1024 * 1024
    col_cap = max(128, target_block_bytes // max(1, rb * itemsize))
    cb = _largest_aligned_divisor(N, 128, col_cap) or N

    grid = (B // rb, N // cb)

    out = pl.pallas_call(
        _pos_enc_kernel,
        out_shape=jax.ShapeDtypeStruct((B, N), x.dtype),
        grid_spec=pltpu.PrefetchScalarGridSpec(
            num_scalar_prefetch=0,
            grid=grid,
            in_specs=[
                pl.BlockSpec((rb, cb), lambda i, j: (i, j)),   # x tile
                pl.BlockSpec((1, cb), lambda i, j: (0, j)),    # pos tile (shared)
            ],
            out_specs=pl.BlockSpec((rb, cb), lambda i, j: (i, j)),
        ),
        compiler_params=pltpu.CompilerParams(
            dimension_semantics=("parallel", "parallel"),
            vmem_limit_bytes=48 * 1024 * 1024,
        ),
        # Donate x's HBM buffer to the output when the caller allows it.
        input_output_aliases=({0: 0} if donate_x else {}),
    )(x2, pos)

    return out.reshape(B, S, D)
    # TODO(synk): in production, fuse this add into the adjacent embedding /
    # dropout / layernorm kernel to remove a full HBM read+write pass.


if __name__ == "__main__":
    # Module config (small): d_hid=32, n_position=200
    d_hid = 32
    n_position = 200
    B, S = 2, 8

    pos_table = make_sinusoid_table(n_position, d_hid)

    key = jax.random.PRNGKey(0)
    x = jax.random.normal(key, (B, S, d_hid), dtype=jnp.float32)

    # Reference computed first (so x could safely be donated if desired).
    ref = x + pos_table[:, :S, :]

    out = positional_encoding(x, pos_table)
    out = jax.block_until_ready(out)

    assert out.shape == (B, S, d_hid)
    np.testing.assert_allclose(np.asarray(out), np.asarray(ref),
                               rtol=1e-6, atol=1e-6)

    print("KERNEL_OK")
</pallas_src>

<mosaic_0001>
module attributes {stable_mosaic.version = 11 : i64} {
  func.func @_pos_enc_kernel(%arg0: i32, %arg1: i32, %arg2: memref<2x256xf32, #tpu.memory_space<vmem>>, %arg3: memref<1x256xf32, #tpu.memory_space<vmem>>, %arg4: memref<2x256xf32, #tpu.memory_space<vmem>>) attributes {dimension_semantics = [#tpu.dimension_semantics<parallel>, #tpu.dimension_semantics<parallel>], iteration_bounds = array<i64: 1, 1>, scalar_prefetch = 0 : i64, scratch_operands = 0 : i64, tpu.core_type = #tpu.core_type<tc>, window_params = [{transform_indices = @transform_0, window_bounds = array<i64: 2, 256>}, {transform_indices = @transform_1, window_bounds = array<i64: 1, 256>}, {transform_indices = @transform_2, window_bounds = array<i64: 2, 256>}]} {
    %c0 = arith.constant 0 : index
    %c0_0 = arith.constant 0 : index
    %0 = vector.load %arg2[%c0, %c0_0] : memref<2x256xf32, #tpu.memory_space<vmem>>, vector<2x256xf32>
    %c0_1 = arith.constant 0 : index
    %c0_2 = arith.constant 0 : index
    %1 = vector.load %arg3[%c0_1, %c0_2] : memref<1x256xf32, #tpu.memory_space<vmem>>, vector<1x256xf32>
    %2 = vector.broadcast %1 : vector<1x256xf32> to vector<2x256xf32>
    %3 = arith.addf %0, %2 : vector<2x256xf32>
    %c0_3 = arith.constant 0 : index
    %c0_4 = arith.constant 0 : index
    %4 = vector.load %arg4[%c0_3, %c0_4] : memref<2x256xf32, #tpu.memory_space<vmem>>, vector<2x256xf32>
    tpu.vector_store %arg4[%c0_3, %c0_4], %3 {strides = array<i32>} : memref<2x256xf32, #tpu.memory_space<vmem>>, vector<2x256xf32>,
    return
  }
  func.func @transform_0(%arg0: i32, %arg1: i32) -> (i32, i32) {
    %c0_i32 = arith.constant 0 : i32
    return %arg0, %arg1 : i32, i32
  }
  func.func @transform_1(%arg0: i32, %arg1: i32) -> (i32, i32) {
    %c0_i32 = arith.constant 0 : i32
    %c0_i32_0 = arith.constant 0 : i32
    return %c0_i32, %arg1 : i32, i32
  }
  func.func @transform_2(%arg0: i32, %arg1: i32) -> (i32, i32) {
    %c0_i32 = arith.constant 0 : i32
    return %arg0, %arg1 : i32, i32
  }
}

</mosaic_0001>

<llo_original>
// kernel: tpu_custom_call.1
$region0: #{tpu_custom_call.1}
  #allocation0 [shape = 'u32[]', space=smem, size = 0x4, offset = 0x4, fixed_abs, tag = 'smem constant byte address 0x4 - core index']
  #allocation1 [shape = 'u32[144,128]{1,0:T(1,128)}', space=vmem, size = 0x12000, scoped, tag = 'internal scratch']
  %s0 = inlined_call_operand.hbm [shape: f32[2,256], index: 0, kind: input, shape index: {}]
  %s1 = inlined_call_operand.vmem [shape: f32[1,256], index: 1, kind: input, shape index: {}]
  %s2 = inlined_call_operand.hbm [shape: f32[2,256], index: 2, kind: output, shape index: {}]
  %s3 = sld [smem:[#allocation0]]
  $region22: #{tpu_custom_call.1} parent=0
    _
  %s5 = ssub.s32 1, %s3
  %s6 = scalar_select 0, %s5, %s3
  $region1: #{tpu_custom_call.1} parent=0
    #allocation2 [shape = 'u8[2048]{0}', space=vmem, size = 0x800, scoped, tag = 'input window, operand 0, single buffered']
    #allocation3 [shape = 's32[1]{0}', space=sflag, size = 0x4, scoped, tag = 'scoped memory for tpu_custom_call.1']
    #allocation4 [shape = 's32[1]{0}', space=sflag, size = 0x4, scoped, tag = 'scoped memory for tpu_custom_call.1']
    #allocation5 [shape = 'u8[2048]{0}', space=vmem, size = 0x800, scoped, tag = 'output window, operand 0, single buffered']
    %7 = vsyncpa [#allocation3], 0
    %8 = vsyncpa [#allocation4], 0
    // Predicated region
    $region2: #{tpu_custom_call.1} parent=1 // pred_check
      _
    $region3: #{tpu_custom_call.1} parent=1 // pred_check_branch
      %10 = sbr.rel (0) target = $region5
    $region4: #{tpu_custom_call.1} parent=1 // pred_region
      %s12 = ssub.s32 64, 64
      %13 = vsyncadd [#allocation3], %s12
      %s15 = sshll.u32 [#allocation2], 4
      %s16 = int_to_ptr.vmem [resolvable:$true] %s15
      %18 = dma.hbm_to_vmem [thread:$0]  %s0, 64, %s16, [#allocation3]
    $region5: #{tpu_custom_call.1} parent=1 // pred_fallthru
      _
    // Predicated region
    $region6: #{tpu_custom_call.1} parent=1 // pred_check
      _
    $region7: #{tpu_custom_call.1} parent=1 // pred_check_branch
      %20 = sbr.rel (0) target = $region9
    $region8: #{tpu_custom_call.1} parent=1 // pred_region
      _
    $region9: #{tpu_custom_call.1} parent=1 // pred_fallthru
      _
    // Predicated region
    $region10: #{tpu_custom_call.1} parent=1 // pred_check
      _
    $region11: #{tpu_custom_call.1} parent=1 // pred_check_branch
      %22 = sbr.rel (0) target = $region13
    $region12: #{tpu_custom_call.1} parent=1 // pred_region
      %23 = dma.done [#allocation3], 64
    $region13: #{tpu_custom_call.1} parent=1 // pred_fallthru
      _
    %v24 = vld [vmem:[#allocation2] sm:$0xf]
    %v25 = vld [vmem:[%s1] sm:$0x3]
    %v27 = vlaneseq
    %v28 = vshrl.u32 %v27, 7
    %v29 = vsub.s32 0, %v28
    %v30 = vrot.slane %v25, %v29
    %v31 = vlaneseq
    %v32 = vshrl.u32 %v31, 7
    %v33 = vsub.s32 1, %v32
    %v34 = vrot.slane %v25, %v33
    %v35 = vcombine.low %v30, %v34
    %v37 = vunpack.c.l.s4 1983009808
    %v38 = vunpack.c.0.s8 %v37
    %v39 = vlaneseq
    %v40 = vshrl.u32 %v39, 7
    %v41 = vsub.s32 %v38, %v40
    %v42 = vrot.slane %v35, %v41
    %v44 = vadd.f32 %v24, %v42
    %45 = vst [vmem:[#allocation5] sm:$0xf] %v44
    // Predicated region
    $region14: #{tpu_custom_call.1} parent=1 // pred_check
      _
    $region15: #{tpu_custom_call.1} parent=1 // pred_check_branch
      %47 = sbr.rel (0) target = $region17
    $region16: #{tpu_custom_call.1} parent=1 // pred_region
      %s49 = ssub.s32 64, 64
      %50 = vsyncadd [#allocation4], %s49
      %s52 = sshll.u32 [#allocation5], 4
      %s53 = int_to_ptr.vmem [resolvable:$true] %s52
      %55 = dma.vmem_to_hbm [thread:$0]  %s53, 64, %s2, [#allocation4]
    $region17: #{tpu_custom_call.1} parent=1 // pred_fallthru
      _
    // Predicated region
    $region18: #{tpu_custom_call.1} parent=1 // pred_check
      _
    $region19: #{tpu_custom_call.1} parent=1 // pred_check_branch
      %57 = sbr.rel (0) target = $region21
    $region20: #{tpu_custom_call.1} parent=1 // pred_region
      %58 = dma.done [#allocation4], 64
    $region21: #{tpu_custom_call.1} parent=1 // pred_fallthru
      _
    %59 = vsyncpa [#allocation3], 1
    %60 = vsyncpa [#allocation4], 1

</llo_original>
